<compile_context>
chip_gen: v5e
topology: v5e:2x2
jax: 0.10.0
libtpu: 0.0.40
codegen_flags: <defaults>
</compile_context>

<pallas_src>
import functools

import jax
import jax.numpy as jnp
from jax.experimental import pallas as pl
from jax.experimental.pallas import tpu as pltpu

EPS = 1e-5


# ----------------------------------------------------------------------------
# Kernel
# ----------------------------------------------------------------------------
def _conv_block_kernel(x_ref, b1_ref, b2_ref,
                       g1_ref, be1_ref, g2_ref, be2_ref,
                       t_ref, wt_ref, bt_ref, o_ref,
                       *, n_img, img_h, img_w, cout):
    f32 = jnp.float32
    nh = n_img * img_h
    m = nh * img_w                    # elements per channel for batch stats
    lanes = img_w * cout              # lane width of every activation slab

    # Per-row "has a valid neighbour above / below inside the same image"
    # masks (VPU iota + compare); hoisted once, reused by both convs.
    row_in_img = jax.lax.broadcasted_iota(jnp.int32, (nh, lanes), 0) % img_h
    not_top = row_in_img != 0
    not_bot = row_in_img != (img_h - 1)

    def conv3x3(slab, b_ref):
        # Width taps + width zero-padding live in the block-banded B_dy
        # (MXU matmuls); the ky = 0/2 height shifts are sublane rolls (XLU)
        # masked at image boundaries (VPU) -- no extra matmul, no pads.
        z0 = jnp.dot(slab, b_ref[0], preferred_element_type=f32)
        z1 = jnp.dot(slab, b_ref[1], preferred_element_type=f32)
        z2 = jnp.dot(slab, b_ref[2], preferred_element_type=f32)
        up = jnp.where(not_top, pltpu.roll(z0, 1, axis=0), 0.0)       # r <- z0[r-1]
        dn = jnp.where(not_bot, pltpu.roll(z2, nh - 1, axis=0), 0.0)  # r <- z2[r+1]
        return up + z1 + dn

    def bn_relu(acc, g_l, be_l):
        # Training-mode BatchNorm, one-pass batch statistics.  Channel c of
        # W-position w sits at lane w*cout + c, so the per-channel reduction
        # over W is a log2(W) cyclic lane-roll tree (XLU slot, cheap); it also
        # leaves the stats lane-broadcast, ready for the normalization.
        s = jnp.sum(acc, axis=0, keepdims=True)           # (1, lanes)
        sq = jnp.sum(acc * acc, axis=0, keepdims=True)    # (1, lanes)
        shift = cout
        while shift < lanes:                              # static unroll
            s = s + pltpu.roll(s, shift, axis=1)
            sq = sq + pltpu.roll(sq, shift, axis=1)
            shift *= 2
        mean = s * (1.0 / m)
        var = jnp.maximum(sq * (1.0 / m) - mean * mean, 0.0)
        scale = g_l * jax.lax.rsqrt(var + EPS)
        return jnp.maximum(acc * scale + (be_l - mean * scale), 0.0)

    # conv1 -> bn1 -> relu   (conv bias dropped: cancels under training BN)
    y = bn_relu(conv3x3(x_ref[...], b1_ref), g1_ref[...], be1_ref[...])

    # + time_mlp(t): t is pre-expanded to one row per output row and the
    # Linear weight/bias are pre-tiled along lanes, so one matmul directly
    # yields the (N*H, W*Cout) broadcast embedding (no in-kernel reshape).
    y = y + (jnp.dot(t_ref[...], wt_ref[...],
                     preferred_element_type=f32) + bt_ref[...])

    # conv2 -> bn2 -> relu
    y = bn_relu(conv3x3(y, b2_ref), g2_ref[...], be2_ref[...])

    o_ref[...] = y.astype(o_ref.dtype)                    # (NH, 128) unmasked


# ----------------------------------------------------------------------------
# Wrapper (layout plumbing + parameter repacking; in a real model the weight
# repacking below would be hoisted to init time and done once)
# ----------------------------------------------------------------------------
def _full_spec(shape):
    return pl.BlockSpec(shape, lambda i: (0,) * len(shape))


def _banded_conv_weights(w_hwio, width):
    """Fold the 3 kx taps + width zero padding into (3, W*Cin, W*Cout)."""
    cin, cout = w_hwio.shape[2], w_hwio.shape[3]
    bands = []
    for dy in range(3):
        b = jnp.zeros((width * cin, width * cout), jnp.float32)
        for dx in range(3):
            # S_dx[x, x'] = 1  iff  x == x' + dx - 1   (zero outside -> SAME pad)
            s_dx = jnp.eye(width, width, k=1 - dx, dtype=jnp.float32)
            b = b + jnp.kron(s_dx, w_hwio[dy, dx].astype(jnp.float32))
        bands.append(b)
    return jnp.stack(bands)


@jax.jit
def conv_block_pallas(x_nchw, t, params):
    """ConvBlock forward. x_nchw: (N, Cin, H, W), t: (N, time_emb_dim)."""
    (w1, b1, g1, be1, w2, b2, g2, be2, wt, bt) = params
    del b1, b2  # conv bias cancels exactly under training-mode BatchNorm

    n, cin, h, w = x_nchw.shape
    cout = w1.shape[-1]
    nh, lanes = n * h, w * cout
    assert w & (w - 1) == 0, "lane roll-tree reduction assumes W is a power of 2"
    # TODO(synk): general W -> replace the roll tree with a (W*Cout, Cout) 0/1
    #             reduction matmul.

    # NCHW -> lane-dense (N*H, W*Cin) slab (wrapper-side layout plumbing).
    x_slab = jnp.transpose(x_nchw, (0, 2, 3, 1)).reshape(nh, w * cin)

    b1m = _banded_conv_weights(w1, w)       # (3, W*Cin,  W*Cout)
    b2m = _banded_conv_weights(w2, w)       # (3, W*Cout, W*Cout)

    def tile_lanes(p):
        return jnp.tile(p.reshape(1, cout).astype(jnp.float32), (1, w))

    g1l, be1l = tile_lanes(g1), tile_lanes(be1)
    g2l, be2l = tile_lanes(g2), tile_lanes(be2)
    btl = tile_lanes(bt)
    wtl = jnp.tile(wt.astype(jnp.float32), (1, w))     # (Tdim, W*Cout)
    t_rows = jnp.repeat(t.astype(jnp.float32), h, axis=0)  # (N*H, Tdim)

    kernel = functools.partial(_conv_block_kernel,
                               n_img=n, img_h=h, img_w=w, cout=cout)
    operands = (x_slab, b1m, b2m, g1l, be1l, g2l, be2l, t_rows, wtl, btl)

    out_slab = pl.pallas_call(
        kernel,
        out_shape=jax.ShapeDtypeStruct((nh, lanes), jnp.float32),
        grid=(1,),
        in_specs=[_full_spec(a.shape) for a in operands],
        out_specs=_full_spec((nh, lanes)),
        compiler_params=pltpu.CompilerParams(
            dimension_semantics=("arbitrary",)),
        # TODO(synk): at realistic UNet sizes, tile H over a "parallel" grid
        # axis (megacore / VMEM fit) with a +1-row halo and cross-tile BN
        # accumulation; one block is the right call at these tiny shapes.
    )(*operands)

    return jnp.transpose(out_slab.reshape(n, h, w, cout), (0, 3, 1, 2))


# ----------------------------------------------------------------------------
# Pure-JAX reference (correctness check only)
# ----------------------------------------------------------------------------
def conv_block_ref(x_nchw, t, params):
    (w1, b1, g1, be1, w2, b2, g2, be2, wt, bt) = params
    x = jnp.transpose(x_nchw, (0, 2, 3, 1))

    def conv(x, w_hwio, b):
        y = jax.lax.conv_general_dilated(
            x, w_hwio, window_strides=(1, 1), padding="SAME",
            dimension_numbers=("NHWC", "HWIO", "NHWC"))
        return y + b.reshape(1, 1, 1, -1)

    def bn_relu(y, g, be):
        mean = jnp.mean(y, axis=(0, 1, 2), keepdims=True)
        var = jnp.mean((y - mean) ** 2, axis=(0, 1, 2), keepdims=True)
        y = (y - mean) * jax.lax.rsqrt(var + EPS)
        y = y * g.reshape(1, 1, 1, -1) + be.reshape(1, 1, 1, -1)
        return jnp.maximum(y, 0.0)

    y = bn_relu(conv(x, w1, b1), g1, be1)
    temb = t @ wt + bt                                  # (N, Cout)
    y = y + temb[:, None, None, :]
    y = bn_relu(conv(y, w2, b2), g2, be2)
    return jnp.transpose(y, (0, 3, 1, 2))


if __name__ == "__main__":
    # Small shapes consistent with the module.
    N, Cin, Cout, H, W, Tdim = 2, 4, 8, 16, 16, 8

    key = jax.random.PRNGKey(0)
    ks = jax.random.split(key, 12)

    # Deterministic synthetic parameters (not a checkpoint load).
    w1 = jax.random.normal(ks[0], (3, 3, Cin, Cout), jnp.float32) * 0.1
    b1 = jax.random.normal(ks[1], (1, Cout), jnp.float32) * 0.1
    g1 = 1.0 + jax.random.normal(ks[2], (1, Cout), jnp.float32) * 0.05
    be1 = jax.random.normal(ks[3], (1, Cout), jnp.float32) * 0.05
    w2 = jax.random.normal(ks[4], (3, 3, Cout, Cout), jnp.float32) * 0.1
    b2 = jax.random.normal(ks[5], (1, Cout), jnp.float32) * 0.1
    g2 = 1.0 + jax.random.normal(ks[6], (1, Cout), jnp.float32) * 0.05
    be2 = jax.random.normal(ks[7], (1, Cout), jnp.float32) * 0.05
    wt = jax.random.normal(ks[8], (Tdim, Cout), jnp.float32) * 0.1  # Linear W^T
    bt = jax.random.normal(ks[9], (1, Cout), jnp.float32) * 0.1

    params = (w1, b1, g1, be1, w2, b2, g2, be2, wt, bt)

    x = jax.random.normal(ks[10], (N, Cin, H, W), jnp.float32)
    t = jax.random.normal(ks[11], (N, Tdim), jnp.float32)

    out = conv_block_pallas(x, t, params)
    out = jax.block_until_ready(out)

    ref = conv_block_ref(x, t, params)
    assert out.shape == (N, Cout, H, W), out.shape
    max_err = float(jnp.max(jnp.abs(out - ref)))
    assert jnp.allclose(out, ref, rtol=1e-4, atol=5e-4), max_err

    print("KERNEL_OK")
</pallas_src>

<mosaic_0001>
module attributes {stable_mosaic.version = 11 : i64} {
  func.func @_conv_block_kernel(%arg0: i32, %arg1: memref<32x64xf32, #tpu.memory_space<vmem>>, %arg2: memref<3x64x128xf32, #tpu.memory_space<vmem>>, %arg3: memref<3x128x128xf32, #tpu.memory_space<vmem>>, %arg4: memref<1x128xf32, #tpu.memory_space<vmem>>, %arg5: memref<1x128xf32, #tpu.memory_space<vmem>>, %arg6: memref<1x128xf32, #tpu.memory_space<vmem>>, %arg7: memref<1x128xf32, #tpu.memory_space<vmem>>, %arg8: memref<32x8xf32, #tpu.memory_space<vmem>>, %arg9: memref<8x128xf32, #tpu.memory_space<vmem>>, %arg10: memref<1x128xf32, #tpu.memory_space<vmem>>, %arg11: memref<32x128xf32, #tpu.memory_space<vmem>>) attributes {dimension_semantics = [#tpu.dimension_semantics<arbitrary>], iteration_bounds = array<i64: 1>, scalar_prefetch = 0 : i64, scratch_operands = 0 : i64, tpu.core_type = #tpu.core_type<tc>, window_params = [{pipeline_mode = #tpu.pipeline_mode<synchronous>, transform_indices = @transform_0, window_bounds = array<i64: 32, 64>}, {pipeline_mode = #tpu.pipeline_mode<synchronous>, transform_indices = @transform_1, window_bounds = array<i64: 3, 64, 128>}, {pipeline_mode = #tpu.pipeline_mode<synchronous>, transform_indices = @transform_2, window_bounds = array<i64: 3, 128, 128>}, {pipeline_mode = #tpu.pipeline_mode<synchronous>, transform_indices = @transform_3, window_bounds = array<i64: 1, 128>}, {pipeline_mode = #tpu.pipeline_mode<synchronous>, transform_indices = @transform_4, window_bounds = array<i64: 1, 128>}, {pipeline_mode = #tpu.pipeline_mode<synchronous>, transform_indices = @transform_5, window_bounds = array<i64: 1, 128>}, {pipeline_mode = #tpu.pipeline_mode<synchronous>, transform_indices = @transform_6, window_bounds = array<i64: 1, 128>}, {pipeline_mode = #tpu.pipeline_mode<synchronous>, transform_indices = @transform_7, window_bounds = array<i64: 32, 8>}, {pipeline_mode = #tpu.pipeline_mode<synchronous>, transform_indices = @transform_8, window_bounds = array<i64: 8, 128>}, {pipeline_mode = #tpu.pipeline_mode<synchronous>, transform_indices = @transform_9, window_bounds = array<i64: 1, 128>}, {pipeline_mode = #tpu.pipeline_mode<synchronous>, transform_indices = @transform_10, window_bounds = array<i64: 32, 128>}]} {
    %0 = tpu.iota {dimensions = array<i32: 0>} : vector<32x128xi32>
    %c16_i32 = arith.constant 16 : i32
    %c0_i32 = arith.constant 0 : i32
    %1 = arith.cmpi eq, %c16_i32, %c0_i32 : i32
    %c1_i32 = arith.constant 1 : i32
    %2 = arith.select %1, %c1_i32, %c16_i32 : i32
    %3 = vector.broadcast %2 : i32 to vector<32x128xi32>
    %4 = arith.remsi %0, %3 : vector<32x128xi32>
    %c0_i32_0 = arith.constant 0 : i32
    %5 = vector.broadcast %c0_i32_0 : i32 to vector<32x128xi32>
    %6 = arith.cmpi ne, %4, %5 : vector<32x128xi32>
    %c0_i32_1 = arith.constant 0 : i32
    %7 = vector.broadcast %c0_i32_1 : i32 to vector<32x128xi32>
    %8 = arith.cmpi slt, %4, %7 : vector<32x128xi32>
    %c0_i32_2 = arith.constant 0 : i32
    %9 = arith.cmpi slt, %2, %c0_i32_2 : i32
    %10 = vector.broadcast %9 : i1 to vector<32x128xi1>
    %11 = vector.broadcast %10 : vector<32x128xi1> to vector<32x128xi1>
    %12 = arith.xori %8, %11 : vector<32x128xi1>
    %13 = arith.andi %12, %6 : vector<32x128xi1>
    %14 = vector.broadcast %2 : i32 to vector<32x128xi32>
    %15 = arith.addi %4, %14 : vector<32x128xi32>
    %16 = arith.select %13, %15, %4 : vector<32x128xi1>, vector<32x128xi32>
    %c0_i32_3 = arith.constant 0 : i32
    %17 = vector.broadcast %c0_i32_3 : i32 to vector<32x128xi32>
    %18 = arith.cmpi ne, %16, %17 : vector<32x128xi32>
    %c15_i32 = arith.constant 15 : i32
    %19 = vector.broadcast %c15_i32 : i32 to vector<32x128xi32>
    %20 = arith.cmpi ne, %16, %19 : vector<32x128xi32>
    %c0 = arith.constant 0 : index
    %c0_4 = arith.constant 0 : index
    %21 = vector.load %arg1[%c0, %c0_4] : memref<32x64xf32, #tpu.memory_space<vmem>>, vector<32x64xf32>
    %c0_5 = arith.constant 0 : index
    %c0_6 = arith.constant 0 : index
    %c0_7 = arith.constant 0 : index
    %22 = vector.load %arg2[%c0_5, %c0_6, %c0_7] : memref<3x64x128xf32, #tpu.memory_space<vmem>>, vector<1x64x128xf32>
    %23 = vector.shape_cast %22 : vector<1x64x128xf32> to vector<64x128xf32>
    %cst = arith.constant dense<0.000000e+00> : vector<32x128xf32>
    %24 = tpu.matmul %21, %23, %cst {dimension_numbers = #tpu.dot_dimension_numbers<[1], [0], [0], [1], [0, 0, 1, 1], [], []>} : vector<32x64xf32>, vector<64x128xf32>, vector<32x128xf32> -> vector<32x128xf32>
    %c1 = arith.constant 1 : index
    %c0_8 = arith.constant 0 : index
    %c0_9 = arith.constant 0 : index
    %25 = vector.load %arg2[%c1, %c0_8, %c0_9] : memref<3x64x128xf32, #tpu.memory_space<vmem>>, vector<1x64x128xf32>
    %26 = vector.shape_cast %25 : vector<1x64x128xf32> to vector<64x128xf32>
    %cst_10 = arith.constant dense<0.000000e+00> : vector<32x128xf32>
    %27 = tpu.matmul %21, %26, %cst_10 {dimension_numbers = #tpu.dot_dimension_numbers<[1], [0], [0], [1], [0, 0, 1, 1], [], []>} : vector<32x64xf32>, vector<64x128xf32>, vector<32x128xf32> -> vector<32x128xf32>
    %c2 = arith.constant 2 : index
    %c0_11 = arith.constant 0 : index
    %c0_12 = arith.constant 0 : index
    %28 = vector.load %arg2[%c2, %c0_11, %c0_12] : memref<3x64x128xf32, #tpu.memory_space<vmem>>, vector<1x64x128xf32>
    %29 = vector.shape_cast %28 : vector<1x64x128xf32> to vector<64x128xf32>
    %cst_13 = arith.constant dense<0.000000e+00> : vector<32x128xf32>
    %30 = tpu.matmul %21, %29, %cst_13 {dimension_numbers = #tpu.dot_dimension_numbers<[1], [0], [0], [1], [0, 0, 1, 1], [], []>} : vector<32x64xf32>, vector<64x128xf32>, vector<32x128xf32> -> vector<32x128xf32>
    %c1_i32_14 = arith.constant 1 : i32
    %31 = tpu.dynamic_rotate %24 by %c1_i32_14 dim 0 : vector<32x128xf32>, i32 -> vector<32x128xf32>
    %cst_15 = arith.constant 0.000000e+00 : f32
    %32 = vector.broadcast %cst_15 : f32 to vector<32x128xf32>
    %33 = arith.select %18, %31, %32 : vector<32x128xi1>, vector<32x128xf32>
    %c31_i32 = arith.constant 31 : i32
    %34 = tpu.dynamic_rotate %30 by %c31_i32 dim 0 : vector<32x128xf32>, i32 -> vector<32x128xf32>
    %cst_16 = arith.constant 0.000000e+00 : f32
    %35 = vector.broadcast %cst_16 : f32 to vector<32x128xf32>
    %36 = arith.select %20, %34, %35 : vector<32x128xi1>, vector<32x128xf32>
    %37 = arith.addf %33, %27 : vector<32x128xf32>
    %38 = arith.addf %37, %36 : vector<32x128xf32>
    %c0_17 = arith.constant 0 : index
    %c0_18 = arith.constant 0 : index
    %39 = vector.load %arg4[%c0_17, %c0_18] : memref<1x128xf32, #tpu.memory_space<vmem>>, vector<1x128xf32>
    %c0_19 = arith.constant 0 : index
    %c0_20 = arith.constant 0 : index
    %40 = vector.load %arg5[%c0_19, %c0_20] : memref<1x128xf32, #tpu.memory_space<vmem>>, vector<1x128xf32>
    %cst_21 = arith.constant dense<0.000000e+00> : vector<128xf32>
    %41 = vector.multi_reduction <add>, %38, %cst_21 [0] : vector<32x128xf32> to vector<128xf32>
    %42 = vector.shape_cast %41 : vector<128xf32> to vector<1x128xf32>
    %43 = arith.mulf %38, %38 : vector<32x128xf32>
    %cst_22 = arith.constant dense<0.000000e+00> : vector<128xf32>
    %44 = vector.multi_reduction <add>, %43, %cst_22 [0] : vector<32x128xf32> to vector<128xf32>
    %45 = vector.shape_cast %44 : vector<128xf32> to vector<1x128xf32>
    %c8_i32 = arith.constant 8 : i32
    %46 = tpu.dynamic_rotate %42 by %c8_i32 dim 1 : vector<1x128xf32>, i32 -> vector<1x128xf32>
    %47 = arith.addf %42, %46 : vector<1x128xf32>
    %c8_i32_23 = arith.constant 8 : i32
    %48 = tpu.dynamic_rotate %45 by %c8_i32_23 dim 1 : vector<1x128xf32>, i32 -> vector<1x128xf32>
    %49 = arith.addf %45, %48 : vector<1x128xf32>
    %c16_i32_24 = arith.constant 16 : i32
    %50 = tpu.dynamic_rotate %47 by %c16_i32_24 dim 1 : vector<1x128xf32>, i32 -> vector<1x128xf32>
    %51 = arith.addf %47, %50 : vector<1x128xf32>
    %c16_i32_25 = arith.constant 16 : i32
    %52 = tpu.dynamic_rotate %49 by %c16_i32_25 dim 1 : vector<1x128xf32>, i32 -> vector<1x128xf32>
    %53 = arith.addf %49, %52 : vector<1x128xf32>
    %c32_i32 = arith.constant 32 : i32
    %54 = tpu.dynamic_rotate %51 by %c32_i32 dim 1 : vector<1x128xf32>, i32 -> vector<1x128xf32>
    %55 = arith.addf %51, %54 : vector<1x128xf32>
    %c32_i32_26 = arith.constant 32 : i32
    %56 = tpu.dynamic_rotate %53 by %c32_i32_26 dim 1 : vector<1x128xf32>, i32 -> vector<1x128xf32>
    %57 = arith.addf %53, %56 : vector<1x128xf32>
    %c64_i32 = arith.constant 64 : i32
    %58 = tpu.dynamic_rotate %55 by %c64_i32 dim 1 : vector<1x128xf32>, i32 -> vector<1x128xf32>
    %59 = arith.addf %55, %58 : vector<1x128xf32>
    %c64_i32_27 = arith.constant 64 : i32
    %60 = tpu.dynamic_rotate %57 by %c64_i32_27 dim 1 : vector<1x128xf32>, i32 -> vector<1x128xf32>
    %61 = arith.addf %57, %60 : vector<1x128xf32>
    %cst_28 = arith.constant 0.001953125 : f32
    %62 = vector.broadcast %cst_28 : f32 to vector<1x128xf32>
    %63 = arith.mulf %59, %62 : vector<1x128xf32>
    %cst_29 = arith.constant 0.001953125 : f32
    %64 = vector.broadcast %cst_29 : f32 to vector<1x128xf32>
    %65 = arith.mulf %61, %64 : vector<1x128xf32>
    %66 = arith.mulf %63, %63 : vector<1x128xf32>
    %67 = arith.subf %65, %66 : vector<1x128xf32>
    %cst_30 = arith.constant 0.000000e+00 : f32
    %68 = vector.broadcast %cst_30 : f32 to vector<1x128xf32>
    %69 = arith.maximumf %67, %68 : vector<1x128xf32>
    %cst_31 = arith.constant 9.99999974E-6 : f32
    %70 = vector.broadcast %cst_31 : f32 to vector<1x128xf32>
    %71 = arith.addf %69, %70 : vector<1x128xf32>
    %72 = math.rsqrt %71 : vector<1x128xf32>
    %73 = arith.mulf %39, %72 : vector<1x128xf32>
    %74 = vector.broadcast %73 : vector<1x128xf32> to vector<32x128xf32>
    %75 = arith.mulf %38, %74 : vector<32x128xf32>
    %76 = arith.mulf %63, %73 : vector<1x128xf32>
    %77 = arith.subf %40, %76 : vector<1x128xf32>
    %78 = vector.broadcast %77 : vector<1x128xf32> to vector<32x128xf32>
    %79 = arith.addf %75, %78 : vector<32x128xf32>
    %cst_32 = arith.constant 0.000000e+00 : f32
    %80 = vector.broadcast %cst_32 : f32 to vector<32x128xf32>
    %81 = arith.maximumf %79, %80 : vector<32x128xf32>
    %c0_33 = arith.constant 0 : index
    %c0_34 = arith.constant 0 : index
    %82 = vector.load %arg8[%c0_33, %c0_34] : memref<32x8xf32, #tpu.memory_space<vmem>>, vector<32x8xf32>
    %c0_35 = arith.constant 0 : index
    %c0_36 = arith.constant 0 : index
    %83 = vector.load %arg9[%c0_35, %c0_36] : memref<8x128xf32, #tpu.memory_space<vmem>>, vector<8x128xf32>
    %cst_37 = arith.constant dense<0.000000e+00> : vector<32x128xf32>
    %84 = tpu.matmul %82, %83, %cst_37 {dimension_numbers = #tpu.dot_dimension_numbers<[1], [0], [0], [1], [0, 0, 1, 1], [], []>} : vector<32x8xf32>, vector<8x128xf32>, vector<32x128xf32> -> vector<32x128xf32>
    %c0_38 = arith.constant 0 : index
    %c0_39 = arith.constant 0 : index
    %85 = vector.load %arg10[%c0_38, %c0_39] : memref<1x128xf32, #tpu.memory_space<vmem>>, vector<1x128xf32>
    %86 = vector.broadcast %85 : vector<1x128xf32> to vector<32x128xf32>
    %87 = arith.addf %84, %86 : vector<32x128xf32>
    %88 = arith.addf %81, %87 : vector<32x128xf32>
    %c0_40 = arith.constant 0 : index
    %c0_41 = arith.constant 0 : index
    %c0_42 = arith.constant 0 : index
    %89 = vector.load %arg3[%c0_40, %c0_41, %c0_42] : memref<3x128x128xf32, #tpu.memory_space<vmem>>, vector<1x128x128xf32>
    %90 = vector.shape_cast %89 : vector<1x128x128xf32> to vector<128x128xf32>
    %cst_43 = arith.constant dense<0.000000e+00> : vector<32x128xf32>
    %91 = tpu.matmul %88, %90, %cst_43 {dimension_numbers = #tpu.dot_dimension_numbers<[1], [0], [0], [1], [0, 0, 1, 1], [], []>} : vector<32x128xf32>, vector<128x128xf32>, vector<32x128xf32> -> vector<32x128xf32>
    %c1_44 = arith.constant 1 : index
    %c0_45 = arith.constant 0 : index
    %c0_46 = arith.constant 0 : index
    %92 = vector.load %arg3[%c1_44, %c0_45, %c0_46] : memref<3x128x128xf32, #tpu.memory_space<vmem>>, vector<1x128x128xf32>
    %93 = vector.shape_cast %92 : vector<1x128x128xf32> to vector<128x128xf32>
    %cst_47 = arith.constant dense<0.000000e+00> : vector<32x128xf32>
    %94 = tpu.matmul %88, %93, %cst_47 {dimension_numbers = #tpu.dot_dimension_numbers<[1], [0], [0], [1], [0, 0, 1, 1], [], []>} : vector<32x128xf32>, vector<128x128xf32>, vector<32x128xf32> -> vector<32x128xf32>
    %c2_48 = arith.constant 2 : index
    %c0_49 = arith.constant 0 : index
    %c0_50 = arith.constant 0 : index
    %95 = vector.load %arg3[%c2_48, %c0_49, %c0_50] : memref<3x128x128xf32, #tpu.memory_space<vmem>>, vector<1x128x128xf32>
    %96 = vector.shape_cast %95 : vector<1x128x128xf32> to vector<128x128xf32>
    %cst_51 = arith.constant dense<0.000000e+00> : vector<32x128xf32>
    %97 = tpu.matmul %88, %96, %cst_51 {dimension_numbers = #tpu.dot_dimension_numbers<[1], [0], [0], [1], [0, 0, 1, 1], [], []>} : vector<32x128xf32>, vector<128x128xf32>, vector<32x128xf32> -> vector<32x128xf32>
    %c1_i32_52 = arith.constant 1 : i32
    %98 = tpu.dynamic_rotate %91 by %c1_i32_52 dim 0 : vector<32x128xf32>, i32 -> vector<32x128xf32>
    %cst_53 = arith.constant 0.000000e+00 : f32
    %99 = vector.broadcast %cst_53 : f32 to vector<32x128xf32>
    %100 = arith.select %18, %98, %99 : vector<32x128xi1>, vector<32x128xf32>
    %c31_i32_54 = arith.constant 31 : i32
    %101 = tpu.dynamic_rotate %97 by %c31_i32_54 dim 0 : vector<32x128xf32>, i32 -> vector<32x128xf32>
    %cst_55 = arith.constant 0.000000e+00 : f32
    %102 = vector.broadcast %cst_55 : f32 to vector<32x128xf32>
    %103 = arith.select %20, %101, %102 : vector<32x128xi1>, vector<32x128xf32>
    %104 = arith.addf %100, %94 : vector<32x128xf32>
    %105 = arith.addf %104, %103 : vector<32x128xf32>
    %c0_56 = arith.constant 0 : index
    %c0_57 = arith.constant 0 : index
    %106 = vector.load %arg6[%c0_56, %c0_57] : memref<1x128xf32, #tpu.memory_space<vmem>>, vector<1x128xf32>
    %c0_58 = arith.constant 0 : index
    %c0_59 = arith.constant 0 : index
    %107 = vector.load %arg7[%c0_58, %c0_59] : memref<1x128xf32, #tpu.memory_space<vmem>>, vector<1x128xf32>
    %cst_60 = arith.constant dense<0.000000e+00> : vector<128xf32>
    %108 = vector.multi_reduction <add>, %105, %cst_60 [0] : vector<32x128xf32> to vector<128xf32>
    %109 = vector.shape_cast %108 : vector<128xf32> to vector<1x128xf32>
    %110 = arith.mulf %105, %105 : vector<32x128xf32>
    %cst_61 = arith.constant dense<0.000000e+00> : vector<128xf32>
    %111 = vector.multi_reduction <add>, %110, %cst_61 [0] : vector<32x128xf32> to vector<128xf32>
    %112 = vector.shape_cast %111 : vector<128xf32> to vector<1x128xf32>
    %c8_i32_62 = arith.constant 8 : i32
    %113 = tpu.dynamic_rotate %109 by %c8_i32_62 dim 1 : vector<1x128xf32>, i32 -> vector<1x128xf32>
    %114 = arith.addf %109, %113 : vector<1x128xf32>
    %c8_i32_63 = arith.constant 8 : i32
    %115 = tpu.dynamic_rotate %112 by %c8_i32_63 dim 1 : vector<1x128xf32>, i32 -> vector<1x128xf32>
    %116 = arith.addf %112, %115 : vector<1x128xf32>
    %c16_i32_64 = arith.constant 16 : i32
    %117 = tpu.dynamic_rotate %114 by %c16_i32_64 dim 1 : vector<1x128xf32>, i32 -> vector<1x128xf32>
    %118 = arith.addf %114, %117 : vector<1x128xf32>
    %c16_i32_65 = arith.constant 16 : i32
    %119 = tpu.dynamic_rotate %116 by %c16_i32_65 dim 1 : vector<1x128xf32>, i32 -> vector<1x128xf32>
    %120 = arith.addf %116, %119 : vector<1x128xf32>
    %c32_i32_66 = arith.constant 32 : i32
    %121 = tpu.dynamic_rotate %118 by %c32_i32_66 dim 1 : vector<1x128xf32>, i32 -> vector<1x128xf32>
    %122 = arith.addf %118, %121 : vector<1x128xf32>
    %c32_i32_67 = arith.constant 32 : i32
    %123 = tpu.dynamic_rotate %120 by %c32_i32_67 dim 1 : vector<1x128xf32>, i32 -> vector<1x128xf32>
    %124 = arith.addf %120, %123 : vector<1x128xf32>
    %c64_i32_68 = arith.constant 64 : i32
    %125 = tpu.dynamic_rotate %122 by %c64_i32_68 dim 1 : vector<1x128xf32>, i32 -> vector<1x128xf32>
    %126 = arith.addf %122, %125 : vector<1x128xf32>
    %c64_i32_69 = arith.constant 64 : i32
    %127 = tpu.dynamic_rotate %124 by %c64_i32_69 dim 1 : vector<1x128xf32>, i32 -> vector<1x128xf32>
    %128 = arith.addf %124, %127 : vector<1x128xf32>
    %cst_70 = arith.constant 0.001953125 : f32
    %129 = vector.broadcast %cst_70 : f32 to vector<1x128xf32>
    %130 = arith.mulf %126, %129 : vector<1x128xf32>
    %cst_71 = arith.constant 0.001953125 : f32
    %131 = vector.broadcast %cst_71 : f32 to vector<1x128xf32>
    %132 = arith.mulf %128, %131 : vector<1x128xf32>
    %133 = arith.mulf %130, %130 : vector<1x128xf32>
    %134 = arith.subf %132, %133 : vector<1x128xf32>
    %cst_72 = arith.constant 0.000000e+00 : f32
    %135 = vector.broadcast %cst_72 : f32 to vector<1x128xf32>
    %136 = arith.maximumf %134, %135 : vector<1x128xf32>
    %cst_73 = arith.constant 9.99999974E-6 : f32
    %137 = vector.broadcast %cst_73 : f32 to vector<1x128xf32>
    %138 = arith.addf %136, %137 : vector<1x128xf32>
    %139 = math.rsqrt %138 : vector<1x128xf32>
    %140 = arith.mulf %106, %139 : vector<1x128xf32>
    %141 = vector.broadcast %140 : vector<1x128xf32> to vector<32x128xf32>
    %142 = arith.mulf %105, %141 : vector<32x128xf32>
    %143 = arith.mulf %130, %140 : vector<1x128xf32>
    %144 = arith.subf %107, %143 : vector<1x128xf32>
    %145 = vector.broadcast %144 : vector<1x128xf32> to vector<32x128xf32>
    %146 = arith.addf %142, %145 : vector<32x128xf32>
    %cst_74 = arith.constant 0.000000e+00 : f32
    %147 = vector.broadcast %cst_74 : f32 to vector<32x128xf32>
    %148 = arith.maximumf %146, %147 : vector<32x128xf32>
    %c0_75 = arith.constant 0 : index
    %c0_76 = arith.constant 0 : index
    %149 = vector.load %arg11[%c0_75, %c0_76] : memref<32x128xf32, #tpu.memory_space<vmem>>, vector<32x128xf32>
    tpu.vector_store %arg11[%c0_75, %c0_76], %148 {strides = array<i32>} : memref<32x128xf32, #tpu.memory_space<vmem>>, vector<32x128xf32>,
    return
  }
  func.func @transform_0(%arg0: i32) -> (i32, i32) {
    %c0_i32 = arith.constant 0 : i32
    %c0_i32_0 = arith.constant 0 : i32
    %c0_i32_1 = arith.constant 0 : i32
    return %c0_i32, %c0_i32_0 : i32, i32
  }
  func.func @transform_1(%arg0: i32) -> (i32, i32, i32) {
    %c0_i32 = arith.constant 0 : i32
    %c0_i32_0 = arith.constant 0 : i32
    %c0_i32_1 = arith.constant 0 : i32
    %c0_i32_2 = arith.constant 0 : i32
    return %c0_i32, %c0_i32_0, %c0_i32_1 : i32, i32, i32
  }
  func.func @transform_2(%arg0: i32) -> (i32, i32, i32) {
    %c0_i32 = arith.constant 0 : i32
    %c0_i32_0 = arith.constant 0 : i32
    %c0_i32_1 = arith.constant 0 : i32
    %c0_i32_2 = arith.constant 0 : i32
    return %c0_i32, %c0_i32_0, %c0_i32_1 : i32, i32, i32
  }
  func.func @transform_3(%arg0: i32) -> (i32, i32) {
    %c0_i32 = arith.constant 0 : i32
    %c0_i32_0 = arith.constant 0 : i32
    %c0_i32_1 = arith.constant 0 : i32
    return %c0_i32, %c0_i32_0 : i32, i32
  }
  func.func @transform_4(%arg0: i32) -> (i32, i32) {
    %c0_i32 = arith.constant 0 : i32
    %c0_i32_0 = arith.constant 0 : i32
    %c0_i32_1 = arith.constant 0 : i32
    return %c0_i32, %c0_i32_0 : i32, i32
  }
  func.func @transform_5(%arg0: i32) -> (i32, i32) {
    %c0_i32 = arith.constant 0 : i32
    %c0_i32_0 = arith.constant 0 : i32
    %c0_i32_1 = arith.constant 0 : i32
    return %c0_i32, %c0_i32_0 : i32, i32
  }
  func.func @transform_6(%arg0: i32) -> (i32, i32) {
    %c0_i32 = arith.constant 0 : i32
    %c0_i32_0 = arith.constant 0 : i32
    %c0_i32_1 = arith.constant 0 : i32
    return %c0_i32, %c0_i32_0 : i32, i32
  }
  func.func @transform_7(%arg0: i32) -> (i32, i32) {
    %c0_i32 = arith.constant 0 : i32
    %c0_i32_0 = arith.constant 0 : i32
    %c0_i32_1 = arith.constant 0 : i32
    return %c0_i32, %c0_i32_0 : i32, i32
  }
  func.func @transform_8(%arg0: i32) -> (i32, i32) {
    %c0_i32 = arith.constant 0 : i32
    %c0_i32_0 = arith.constant 0 : i32
    %c0_i32_1 = arith.constant 0 : i32
    return %c0_i32, %c0_i32_0 : i32, i32
  }
  func.func @transform_9(%arg0: i32) -> (i32, i32) {
    %c0_i32 = arith.constant 0 : i32
    %c0_i32_0 = arith.constant 0 : i32
    %c0_i32_1 = arith.constant 0 : i32
    return %c0_i32, %c0_i32_0 : i32, i32
  }
  func.func @transform_10(%arg0: i32) -> (i32, i32) {
    %c0_i32 = arith.constant 0 : i32
    %c0_i32_0 = arith.constant 0 : i32
    %c0_i32_1 = arith.constant 0 : i32
    return %c0_i32, %c0_i32_0 : i32, i32
  }
}

</mosaic_0001>

<llo_original>
// kernel: tile.59
$region0: #{tile.59}
  %s0 = inlined_call_operand.vmem [shape: f32[8,16,8], index: 0, kind: input, shape index: {}]
  %s1 = inlined_call_operand.vmem [shape: f32[8,128], index: 1, kind: output, shape index: {}]
  %s2 = smov 3
  %v3 = vld [vmem:[%s0] ss:$16 sm:%s2]
  %s4 = smov 12
  %v5 = vld [vmem:[%s0] ss:$16 sm:%s4]
  %vm6 = vcmask 1043458
  %v7 = vsel %vm6, %v5, %v3
  %s8 = smov 48
  %v9 = vld [vmem:[%s0] ss:$16 sm:%s8]
  %vm10 = vcmask 1045508
  %v11 = vsel %vm10, %v9, %v7
  %s12 = smov 192
  %v13 = vld [vmem:[%s0] ss:$16 sm:%s12]
  %vm14 = vcmask 1047558
  %v15 = vsel %vm14, %v13, %v11
  %vm16 = vcmask 64512
  %17 = vst.msk [vmem:[%s1] sm:$0xff] %vm16, %v15
  %s18 = scalar_lea.vmem %s0, 15
  %s19 = smov 3
  %v20 = vld [vmem:[%s18] ss:$16 sm:%s19]
  %s21 = scalar_lea.vmem %s0, 15
  %s22 = smov 12
  %v23 = vld [vmem:[%s21] ss:$16 sm:%s22]
  %vm24 = vcmask 1043458
  %v25 = vsel %vm24, %v23, %v20
  %s26 = scalar_lea.vmem %s0, 15
  %s27 = smov 48
  %v28 = vld [vmem:[%s26] ss:$16 sm:%s27]
  %vm29 = vcmask 1045508
  %v30 = vsel %vm29, %v28, %v25
  %s31 = scalar_lea.vmem %s0, 15
  %s32 = smov 192
  %v33 = vld [vmem:[%s31] ss:$16 sm:%s32]
  %vm34 = vcmask 1047558
  %v35 = vsel %vm34, %v33, %v30
  %36 = vrot.lane.b32.xlu0 %v35, 120
  %v37 = vpop.permute.xlu0 %36
  %vm38 = vcmask 1048512
  %39 = vst.msk [vmem:[%s1] sm:$0xff] %vm38, %v37
  %s40 = scalar_lea.vmem %s0, 14
  %s41 = smov 3
  %v42 = vld [vmem:[%s40] ss:$16 sm:%s41]
  %s43 = scalar_lea.vmem %s0, 14
  %s44 = smov 12
  %v45 = vld [vmem:[%s43] ss:$16 sm:%s44]
  %vm46 = vcmask 1043458
  %v47 = vsel %vm46, %v45, %v42
  %s48 = scalar_lea.vmem %s0, 14
  %s49 = smov 48
  %v50 = vld [vmem:[%s48] ss:$16 sm:%s49]
  %vm51 = vcmask 1045508
  %v52 = vsel %vm51, %v50, %v47
  %s53 = scalar_lea.vmem %s0, 14
  %s54 = smov 192
  %v55 = vld [vmem:[%s53] ss:$16 sm:%s54]
  %vm56 = vcmask 1047558
  %v57 = vsel %vm56, %v55, %v52
  %58 = vrot.lane.b32.xlu0 %v57, 112
  %v59 = vpop.permute.xlu0 %58
  %vm60 = vcmask 982912
  %61 = vst.msk [vmem:[%s1] sm:$0xff] %vm60, %v59
  %s62 = scalar_lea.vmem %s0, 13
  %s63 = smov 3
  %v64 = vld [vmem:[%s62] ss:$16 sm:%s63]
  %s65 = scalar_lea.vmem %s0, 13
  %s66 = smov 12
  %v67 = vld [vmem:[%s65] ss:$16 sm:%s66]
  %vm68 = vcmask 1043458
  %v69 = vsel %vm68, %v67, %v64
  %s70 = scalar_lea.vmem %s0, 13
  %s71 = smov 48
  %v72 = vld [vmem:[%s70] ss:$16 sm:%s71]
  %vm73 = vcmask 1045508
  %v74 = vsel %vm73, %v72, %v69
  %s75 = scalar_lea.vmem %s0, 13
  %s76 = smov 192
  %v77 = vld [vmem:[%s75] ss:$16 sm:%s76]
  %vm78 = vcmask 1047558
  %v79 = vsel %vm78, %v77, %v74
  %80 = vrot.lane.b32.xlu0 %v79, 104
  %v81 = vpop.permute.xlu0 %80
  %vm82 = vcmask 917312
  %83 = vst.msk [vmem:[%s1] sm:$0xff] %vm82, %v81
  %s84 = scalar_lea.vmem %s0, 12
  %s85 = smov 3
  %v86 = vld [vmem:[%s84] ss:$16 sm:%s85]
  %s87 = scalar_lea.vmem %s0, 12
  %s88 = smov 12
  %v89 = vld [vmem:[%s87] ss:$16 sm:%s88]
  %vm90 = vcmask 1043458
  %v91 = vsel %vm90, %v89, %v86
  %s92 = scalar_lea.vmem %s0, 12
  %s93 = smov 48
  %v94 = vld [vmem:[%s92] ss:$16 sm:%s93]
  %vm95 = vcmask 1045508
  %v96 = vsel %vm95, %v94, %v91
  %s97 = scalar_lea.vmem %s0, 12
  %s98 = smov 192
  %v99 = vld [vmem:[%s97] ss:$16 sm:%s98]
  %vm100 = vcmask 1047558
  %v101 = vsel %vm100, %v99, %v96
  %102 = vrot.lane.b32.xlu0 %v101, 96
  %v103 = vpop.permute.xlu0 %102
  %vm104 = vcmask 851712
  %105 = vst.msk [vmem:[%s1] sm:$0xff] %vm104, %v103
  %s106 = scalar_lea.vmem %s0, 11
  %s107 = smov 3
  %v108 = vld [vmem:[%s106] ss:$16 sm:%s107]
  %s109 = scalar_lea.vmem %s0, 11
  %s110 = smov 12
  %v111 = vld [vmem:[%s109] ss:$16 sm:%s110]
  %vm112 = vcmask 1043458
  %v113 = vsel %vm112, %v111, %v108
  %s114 = scalar_lea.vmem %s0, 11
  %s115 = smov 48
  %v116 = vld [vmem:[%s114] ss:$16 sm:%s115]
  %vm117 = vcmask 1045508
  %v118 = vsel %vm117, %v116, %v113
  %s119 = scalar_lea.vmem %s0, 11
  %s120 = smov 192
  %v121 = vld [vmem:[%s119] ss:$16 sm:%s120]
  %vm122 = vcmask 1047558
  %v123 = vsel %vm122, %v121, %v118
  %124 = vrot.lane.b32.xlu0 %v123, 88
  %v125 = vpop.permute.xlu0 %124
  %vm126 = vcmask 786112
  %127 = vst.msk [vmem:[%s1] sm:$0xff] %vm126, %v125
  %s128 = scalar_lea.vmem %s0, 10
  %s129 = smov 3
  %v130 = vld [vmem:[%s128] ss:$16 sm:%s129]
  %s131 = scalar_lea.vmem %s0, 10
  %s132 = smov 12
  %v133 = vld [vmem:[%s131] ss:$16 sm:%s132]
  %vm134 = vcmask 1043458
  %v135 = vsel %vm134, %v133, %v130
  %s136 = scalar_lea.vmem %s0, 10
  %s137 = smov 48
  %v138 = vld [vmem:[%s136] ss:$16 sm:%s137]
  %vm139 = vcmask 1045508
  %v140 = vsel %vm139, %v138, %v135
  %s141 = scalar_lea.vmem %s0, 10
  %s142 = smov 192
  %v143 = vld [vmem:[%s141] ss:$16 sm:%s142]
  %vm144 = vcmask 1047558
  %v145 = vsel %vm144, %v143, %v140
  %146 = vrot.lane.b32.xlu0 %v145, 80
  %v147 = vpop.permute.xlu0 %146
  %vm148 = vcmask 720512
  %149 = vst.msk [vmem:[%s1] sm:$0xff] %vm148, %v147
  %s150 = scalar_lea.vmem %s0, 9
  %s151 = smov 3
  %v152 = vld [vmem:[%s150] ss:$16 sm:%s151]
  %s153 = scalar_lea.vmem %s0, 9
  %s154 = smov 12
  %v155 = vld [vmem:[%s153] ss:$16 sm:%s154]
  %vm156 = vcmask 1043458
  %v157 = vsel %vm156, %v155, %v152
  %s158 = scalar_lea.vmem %s0, 9
  %s159 = smov 48
  %v160 = vld [vmem:[%s158] ss:$16 sm:%s159]
  %vm161 = vcmask 1045508
  %v162 = vsel %vm161, %v160, %v157
  %s163 = scalar_lea.vmem %s0, 9
  %s164 = smov 192
  %v165 = vld [vmem:[%s163] ss:$16 sm:%s164]
  %vm166 = vcmask 1047558
  %v167 = vsel %vm166, %v165, %v162
  %168 = vrot.lane.b32.xlu0 %v167, 72
  %v169 = vpop.permute.xlu0 %168
  %vm170 = vcmask 654912
  %171 = vst.msk [vmem:[%s1] sm:$0xff] %vm170, %v169
  %s172 = scalar_lea.vmem %s0, 8
  %s173 = smov 3
  %v174 = vld [vmem:[%s172] ss:$16 sm:%s173]
  %s175 = scalar_lea.vmem %s0, 8
  %s176 = smov 12
  %v177 = vld [vmem:[%s175] ss:$16 sm:%s176]
  %vm178 = vcmask 1043458
  %v179 = vsel %vm178, %v177, %v174
  %s180 = scalar_lea.vmem %s0, 8
  %s181 = smov 48
  %v182 = vld [vmem:[%s180] ss:$16 sm:%s181]
  %vm183 = vcmask 1045508
  %v184 = vsel %vm183, %v182, %v179
  %s185 = scalar_lea.vmem %s0, 8
  %s186 = smov 192
  %v187 = vld [vmem:[%s185] ss:$16 sm:%s186]
  %vm188 = vcmask 1047558
  %v189 = vsel %vm188, %v187, %v184
  %190 = vrot.lane.b32.xlu0 %v189, 64
  %v191 = vpop.permute.xlu0 %190
  %vm192 = vcmask 589312
  %193 = vst.msk [vmem:[%s1] sm:$0xff] %vm192, %v191
  %s194 = scalar_lea.vmem %s0, 7
  %s195 = smov 3
  %v196 = vld [vmem:[%s194] ss:$16 sm:%s195]
  %s197 = scalar_lea.vmem %s0, 7
  %s198 = smov 12
  %v199 = vld [vmem:[%s197] ss:$16 sm:%s198]
  %vm200 = vcmask 1043458
  %v201 = vsel %vm200, %v199, %v196
  %s202 = scalar_lea.vmem %s0, 7
  %s203 = smov 48
  %v204 = vld [vmem:[%s202] ss:$16 sm:%s203]
  %vm205 = vcmask 1045508
  %v206 = vsel %vm205, %v204, %v201
  %s207 = scalar_lea.vmem %s0, 7
  %s208 = smov 192
  %v209 = vld [vmem:[%s207] ss:$16 sm:%s208]
  %vm210 = vcmask 1047558
  %v211 = vsel %vm210, %v209, %v206
  %212 = vrot.lane.b32.xlu0 %v211, 56
  %v213 = vpop.permute.xlu0 %212
  %vm214 = vcmask 523712
  %215 = vst.msk [vmem:[%s1] sm:$0xff] %vm214, %v213
  %s216 = scalar_lea.vmem %s0, 6
  %s217 = smov 3
  %v218 = vld [vmem:[%s216] ss:$16 sm:%s217]
  %s219 = scalar_lea.vmem %s0, 6
  %s220 = smov 12
  %v221 = vld [vmem:[%s219] ss:$16 sm:%s220]
  %vm222 = vcmask 1043458
  %v223 = vsel %vm222, %v221, %v218
  %s224 = scalar_lea.vmem %s0, 6
  %s225 = smov 48
  %v226 = vld [vmem:[%s224] ss:$16 sm:%s225]
  %vm227 = vcmask 1045508
  %v228 = vsel %vm227, %v226, %v223
  %s229 = scalar_lea.vmem %s0, 6
  %s230 = smov 192
  %v231 = vld [vmem:[%s229] ss:$16 sm:%s230]
  %vm232 = vcmask 1047558
  %v233 = vsel %vm232, %v231, %v228
  %234 = vrot.lane.b32.xlu0 %v233, 48
  %v235 = vpop.permute.xlu0 %234
  %vm236 = vcmask 458112
  %237 = vst.msk [vmem:[%s1] sm:$0xff] %vm236, %v235
  %s238 = scalar_lea.vmem %s0, 5
  %s239 = smov 3
  %v240 = vld [vmem:[%s238] ss:$16 sm:%s239]
  %s241 = scalar_lea.vmem %s0, 5
  %s242 = smov 12
  %v243 = vld [vmem:[%s241] ss:$16 sm:%s242]
  %vm244 = vcmask 1043458
  %v245 = vsel %vm244, %v243, %v240
  %s246 = scalar_lea.vmem %s0, 5
  %s247 = smov 48
  %v248 = vld [vmem:[%s246] ss:$16 sm:%s247]
  %vm249 = vcmask 1045508
  %v250 = vsel %vm249, %v248, %v245
  %s251 = scalar_lea.vmem %s0, 5
  %s252 = smov 192
  %v253 = vld [vmem:[%s251] ss:$16 sm:%s252]
  %vm254 = vcmask 1047558
  %v255 = vsel %vm254, %v253, %v250
  %256 = vrot.lane.b32.xlu0 %v255, 40
  %v257 = vpop.permute.xlu0 %256
  %vm258 = vcmask 392512
  %259 = vst.msk [vmem:[%s1] sm:$0xff] %vm258, %v257
  %s260 = scalar_lea.vmem %s0, 4
  %s261 = smov 3
  %v262 = vld [vmem:[%s260] ss:$16 sm:%s261]
  %s263 = scalar_lea.vmem %s0, 4
  %s264 = smov 12
  %v265 = vld [vmem:[%s263] ss:$16 sm:%s264]
  %vm266 = vcmask 1043458
  %v267 = vsel %vm266, %v265, %v262
  %s268 = scalar_lea.vmem %s0, 4
  %s269 = smov 48
  %v270 = vld [vmem:[%s268] ss:$16 sm:%s269]
  %vm271 = vcmask 1045508
  %v272 = vsel %vm271, %v270, %v267
  %s273 = scalar_lea.vmem %s0, 4
  %s274 = smov 192
  %v275 = vld [vmem:[%s273] ss:$16 sm:%s274]
  %vm276 = vcmask 1047558
  %v277 = vsel %vm276, %v275, %v272
  %278 = vrot.lane.b32.xlu0 %v277, 32
  %v279 = vpop.permute.xlu0 %278
  %vm280 = vcmask 326912
  %281 = vst.msk [vmem:[%s1] sm:$0xff] %vm280, %v279
  %s282 = scalar_lea.vmem %s0, 3
  %s283 = smov 3
  %v284 = vld [vmem:[%s282] ss:$16 sm:%s283]
  %s285 = scalar_lea.vmem %s0, 3
  %s286 = smov 12
  %v287 = vld [vmem:[%s285] ss:$16 sm:%s286]
  %vm288 = vcmask 1043458
  %v289 = vsel %vm288, %v287, %v284
  %s290 = scalar_lea.vmem %s0, 3
  %s291 = smov 48
  %v292 = vld [vmem:[%s290] ss:$16 sm:%s291]
  %vm293 = vcmask 1045508
  %v294 = vsel %vm293, %v292, %v289
  %s295 = scalar_lea.vmem %s0, 3
  %s296 = smov 192
  %v297 = vld [vmem:[%s295] ss:$16 sm:%s296]
  %vm298 = vcmask 1047558
  %v299 = vsel %vm298, %v297, %v294
  %300 = vrot.lane.b32.xlu0 %v299, 24
  %v301 = vpop.permute.xlu0 %300
  %vm302 = vcmask 261312
  %303 = vst.msk [vmem:[%s1] sm:$0xff] %vm302, %v301
  %s304 = scalar_lea.vmem %s0, 2
  %s305 = smov 3
  %v306 = vld [vmem:[%s304] ss:$16 sm:%s305]
  %s307 = scalar_lea.vmem %s0, 2
  %s308 = smov 12
  %v309 = vld [vmem:[%s307] ss:$16 sm:%s308]
  %vm310 = vcmask 1043458
  %v311 = vsel %vm310, %v309, %v306
  %s312 = scalar_lea.vmem %s0, 2
  %s313 = smov 48
  %v314 = vld [vmem:[%s312] ss:$16 sm:%s313]
  %vm315 = vcmask 1045508
  %v316 = vsel %vm315, %v314, %v311
  %s317 = scalar_lea.vmem %s0, 2
  %s318 = smov 192
  %v319 = vld [vmem:[%s317] ss:$16 sm:%s318]
  %vm320 = vcmask 1047558
  %v321 = vsel %vm320, %v319, %v316
  %322 = vrot.lane.b32.xlu0 %v321, 16
  %v323 = vpop.permute.xlu0 %322
  %vm324 = vcmask 195712
  %325 = vst.msk [vmem:[%s1] sm:$0xff] %vm324, %v323
  %s326 = scalar_lea.vmem %s0, 1
  %s327 = smov 3
  %v328 = vld [vmem:[%s326] ss:$16 sm:%s327]
  %s329 = scalar_lea.vmem %s0, 1
  %s330 = smov 12
  %v331 = vld [vmem:[%s329] ss:$16 sm:%s330]
  %vm332 = vcmask 1043458
  %v333 = vsel %vm332, %v331, %v328
  %s334 = scalar_lea.vmem %s0, 1
  %s335 = smov 48
  %v336 = vld [vmem:[%s334] ss:$16 sm:%s335]
  %vm337 = vcmask 1045508
  %v338 = vsel %vm337, %v336, %v333
  %s339 = scalar_lea.vmem %s0, 1
  %s340 = smov 192
  %v341 = vld [vmem:[%s339] ss:$16 sm:%s340]
  %vm342 = vcmask 1047558
  %v343 = vsel %vm342, %v341, %v338
  %344 = vrot.lane.b32.xlu0 %v343, 8
  %v345 = vpop.permute.xlu0 %344
  %vm346 = vcmask 130112
  %347 = vst.msk [vmem:[%s1] sm:$0xff] %vm346, %v345

// kernel: conv_block_pallas.1
$region0: #{conv_block_pallas.1}
  #allocation0 [shape = 'u32[]', space=smem, size = 0x4, offset = 0x4, fixed_abs, tag = 'smem constant byte address 0x4 - core index']
  #allocation1 [shape = 'u32[72,128]{1,0:T(1,128)}', space=vmem, size = 0x9000, scoped, tag = 'internal scratch']
  %s0 = inlined_call_operand.vmem [shape: f32[32,64], index: 0, kind: input, shape index: {}]
  %s1 = inlined_call_operand.vmem [shape: f32[3,64,128], index: 1, kind: input, shape index: {}]
  %s2 = inlined_call_operand.vmem [shape: f32[3,128,128], index: 2, kind: input, shape index: {}]
  %s3 = inlined_call_operand.vmem [shape: f32[1,128], index: 3, kind: input, shape index: {}]
  %s4 = inlined_call_operand.vmem [shape: f32[1,128], index: 4, kind: input, shape index: {}]
  %s5 = inlined_call_operand.vmem [shape: f32[1,128], index: 5, kind: input, shape index: {}]
  %s6 = inlined_call_operand.vmem [shape: f32[1,128], index: 6, kind: input, shape index: {}]
  %s7 = inlined_call_operand.vmem [shape: f32[32,8], index: 7, kind: input, shape index: {}]
  %s8 = inlined_call_operand.vmem [shape: f32[8,128], index: 8, kind: input, shape index: {}]
  %s9 = inlined_call_operand.vmem [shape: f32[1,128], index: 9, kind: input, shape index: {}]
  %s10 = inlined_call_operand.vmem [shape: f32[32,128], index: 10, kind: output, shape index: {}]
  %s11 = sld [smem:[#allocation0]]
  $region50: #{conv_block_pallas.1} parent=0
    _
  %s13 = ssub.s32 1, %s11
  %s14 = scalar_select 0, %s13, %s11
  // Predicated region
  $region2: #{conv_block_pallas.1} parent=0 // pred_check
    _
  $region3: #{conv_block_pallas.1} parent=0 // pred_check_branch
    %16 = sbr.rel (0) target = $region5
  $region4: #{conv_block_pallas.1} parent=0 // pred_region
    _
  $region5: #{conv_block_pallas.1} parent=0 // pred_fallthru
    _
  // Predicated region
  $region6: #{conv_block_pallas.1} parent=0 // pred_check
    _
  $region7: #{conv_block_pallas.1} parent=0 // pred_check_branch
    %18 = sbr.rel (0) target = $region9
  $region8: #{conv_block_pallas.1} parent=0 // pred_region
    _
  $region9: #{conv_block_pallas.1} parent=0 // pred_fallthru
    _
  // Predicated region
  $region10: #{conv_block_pallas.1} parent=0 // pred_check
    _
  $region11: #{conv_block_pallas.1} parent=0 // pred_check_branch
    %20 = sbr.rel (0) target = $region13
  $region12: #{conv_block_pallas.1} parent=0 // pred_region
    _
  $region13: #{conv_block_pallas.1} parent=0 // pred_fallthru
    _
  // Predicated region
  $region14: #{conv_block_pallas.1} parent=0 // pred_check
    _
  $region15: #{conv_block_pallas.1} parent=0 // pred_check_branch
    %22 = sbr.rel (0) target = $region17
  $region16: #{conv_block_pallas.1} parent=0 // pred_region
    _
  $region17: #{conv_block_pallas.1} parent=0 // pred_fallthru
    _
  // Predicated region
  $region18: #{conv_block_pallas.1} parent=0 // pred_check
    _
  $region19: #{conv_block_pallas.1} parent=0 // pred_check_branch
    %24 = sbr.rel (0) target = $region21
  $region20: #{conv_block_pallas.1} parent=0 // pred_region
    _
  $region21: #{conv_block_pallas.1} parent=0 // pred_fallthru
    _
  // Predicated region
  $region22: #{conv_block_pallas.1} parent=0 // pred_check
    _
  $region23: #{conv_block_pallas.1} parent=0 // pred_check_branch
    %26 = sbr.rel (0) target = $region25
  $region24: #{conv_block_pallas.1} parent=0 // pred_region
    _
  $region25: #{conv_block_pallas.1} parent=0 // pred_fallthru
    _
  // Predicated region
  $region26: #{conv_block_pallas.1} parent=0 // pred_check
    _
  $region27: #{conv_block_pallas.1} parent=0 // pred_check_branch
    %28 = sbr.rel (0) target = $region29
  $region28: #{conv_block_pallas.1} parent=0 // pred_region
    _
  $region29: #{conv_block_pallas.1} parent=0 // pred_fallthru
    _
  // Predicated region
  $region30: #{conv_block_pallas.1} parent=0 // pred_check
    _
  $region31: #{conv_block_pallas.1} parent=0 // pred_check_branch
    %30 = sbr.rel (0) target = $region33
  $region32: #{conv_block_pallas.1} parent=0 // pred_region
    _
  $region33: #{conv_block_pallas.1} parent=0 // pred_fallthru
    _
  // Predicated region
  $region34: #{conv_block_pallas.1} parent=0 // pred_check
    _
  $region35: #{conv_block_pallas.1} parent=0 // pred_check_branch
    %32 = sbr.rel (0) target = $region37
  $region36: #{conv_block_pallas.1} parent=0 // pred_region
    _
  $region37: #{conv_block_pallas.1} parent=0 // pred_fallthru
    _
  // Predicated region
  $region38: #{conv_block_pallas.1} parent=0 // pred_check
    _
  $region39: #{conv_block_pallas.1} parent=0 // pred_check_branch
    %34 = sbr.rel (0) target = $region41
  $region40: #{conv_block_pallas.1} parent=0 // pred_region
    _
  $region41: #{conv_block_pallas.1} parent=0 // pred_fallthru
    _
  %v35 = vlaneseq
  %v36 = vshrl.u32 %v35, 7
  %v37 = vadd.s32 %v36, 8
  %v38 = vadd.s32 %v36, 16
  %v39 = vadd.s32 %v36, 24
  %vm40 = vcmp.lt.s32.totalorder %v36, 0
  %v41 = vsub.s32 0, %v36
  %v42 = vsel %vm40, %v41, %v36
  %v43 = vshrl.u32 %v42, 4
  %v44 = vand.u32 %v42, 15
  %v45 = vsub.s32 0, %v44
  %v46 = vsel %vm40, %v45, %v44
  %vm47 = vcmp.lt.s32.totalorder %v37, 0
  %v48 = vsub.s32 0, %v37
  %v49 = vsel %vm47, %v48, %v37
  %v50 = vshrl.u32 %v49, 4
  %v51 = vand.u32 %v49, 15
  %v52 = vsub.s32 0, %v51
  %v53 = vsel %vm47, %v52, %v51
  %vm54 = vcmp.lt.s32.totalorder %v38, 0
  %v55 = vsub.s32 0, %v38
  %v56 = vsel %vm54, %v55, %v38
  %v57 = vshrl.u32 %v56, 4
  %v58 = vand.u32 %v56, 15
  %v59 = vsub.s32 0, %v58
  %v60 = vsel %vm54, %v59, %v58
  %vm61 = vcmp.lt.s32.totalorder %v39, 0
  %v62 = vsub.s32 0, %v39
  %v63 = vsel %vm61, %v62, %v39
  %v64 = vshrl.u32 %v63, 4
  %v65 = vand.u32 %v63, 15
  %v66 = vsub.s32 0, %v65
  %v67 = vsel %vm61, %v66, %v65
  %vm68 = vcmp.ne.s32.totalorder %v46, 0
  %vm69 = vcmp.ne.s32.totalorder %v53, 0
  %vm70 = vcmp.ne.s32.totalorder %v60, 0
  %vm71 = vcmp.ne.s32.totalorder %v67, 0
  %vm72 = vcmp.lt.s32.totalorder %v46, 0
  %vm73 = vcmp.lt.s32.totalorder %v53, 0
  %vm74 = vcmp.lt.s32.totalorder %v60, 0
  %vm75 = vcmp.lt.s32.totalorder %v67, 0
  %vm76 = vmand %vm72, %vm68
  %vm77 = vmand %vm73, %vm69
  %vm78 = vmand %vm74, %vm70
  %vm79 = vmand %vm75, %vm71
  %v80 = vadd.s32 %v46, 16
  %v81 = vadd.s32 %v53, 16
  %v82 = vadd.s32 %v60, 16
  %v83 = vadd.s32 %v67, 16
  %v84 = vsel %vm76, %v80, %v46
  %v85 = vsel %vm77, %v81, %v53
  %v86 = vsel %vm78, %v82, %v60
  %v87 = vsel %vm79, %v83, %v67
  %vm88 = vcmp.ne.s32.totalorder %v84, 0
  %vm89 = vcmp.ne.s32.totalorder %v85, 0
  %vm90 = vcmp.ne.s32.totalorder %v86, 0
  %vm91 = vcmp.ne.s32.totalorder %v87, 0
  %vm92 = vcmp.ne.s32.totalorder %v84, 15
  %vm93 = vcmp.ne.s32.totalorder %v85, 15
  %vm94 = vcmp.ne.s32.totalorder %v86, 15
  %vm95 = vcmp.ne.s32.totalorder %v87, 15
  %v96 = vld [vmem:[%s0] sm:$0xff]
  %v97 = vld [vmem:[%s0 + $0x8] sm:$0xff]
  %v98 = vld [vmem:[%s0 + $0x10] sm:$0xff]
  %v99 = vld [vmem:[%s0 + $0x18] sm:$0xff]
  %v100 = vld [vmem:[%s1] sm:$0xff]
  %v101 = vld [vmem:[%s1 + $0x8] sm:$0xff]
  %v102 = vld [vmem:[%s1 + $0x10] sm:$0xff]
  %v103 = vld [vmem:[%s1 + $0x18] sm:$0xff]
  %v104 = vld [vmem:[%s1 + $0x20] sm:$0xff]
  %v105 = vld [vmem:[%s1 + $0x28] sm:$0xff]
  %v106 = vld [vmem:[%s1 + $0x30] sm:$0xff]
  %v107 = vld [vmem:[%s1 + $0x38] sm:$0xff]
  %vm108 = vcmask 523264
  %v110 = vsel %vm108, %v96, 0
  %v113 = vsel %vm108, %v97, 0
  %v116 = vsel %vm108, %v98, 0
  %v119 = vsel %vm108, %v99, 0
  %121 = vmatpush.msra.mxu0 0.0
  %122 = vmatpush.msra.mxu0 0.0
  %123 = vmatpush.msra.mxu0 0.0
  %124 = vmatpush.msra.mxu0 0.0
  %125 = vmatpush.msra.mxu0 0.0
  %126 = vmatpush.msra.mxu0 0.0
  %127 = vmatpush.msra.mxu0 0.0
  %128 = vmatpush.msra.mxu0 0.0
  %129 = vmatpush.msra.mxu0 %v107
  %130 = vmatpush.msra.mxu0 %v106
  %131 = vmatpush.msra.mxu0 %v105
  %132 = vmatpush.msra.mxu0 %v104
  %133 = vmatpush.msra.mxu0 %v103
  %134 = vmatpush.msra.mxu0 %v102
  %135 = vmatpush.msra.mxu0 %v101
  %136 = vmatpush.msra.mxu0 %v100
  %137 = vmatmul.f32.gmra.mxu0 %v110
  %v138 = vpop.f32.mrf.mxu0
  %v139 = vadd.f32 0.0, %v138
  %140 = vmatmul.f32.gmra.mxu0 %v113
  %v141 = vpop.f32.mrf.mxu0
  %v142 = vadd.f32 0.0, %v141
  %143 = vmatmul.f32.gmra.mxu0 %v116
  %v144 = vpop.f32.mrf.mxu0
  %v145 = vadd.f32 0.0, %v144
  %146 = vmatmul.f32.gmra.mxu0 %v119
  %v147 = vpop.f32.mrf.mxu0
  %v148 = vadd.f32 0.0, %v147
  %149 = vdwg.mxu0
  %s150 = scalar_lea.vmem %s1, 64
  %v151 = vld [vmem:[%s150] sm:$0xff]
  %v152 = vld [vmem:[%s150 + $0x8] sm:$0xff]
  %v153 = vld [vmem:[%s150 + $0x10] sm:$0xff]
  %v154 = vld [vmem:[%s150 + $0x18] sm:$0xff]
  %v155 = vld [vmem:[%s150 + $0x20] sm:$0xff]
  %v156 = vld [vmem:[%s150 + $0x28] sm:$0xff]
  %v157 = vld [vmem:[%s150 + $0x30] sm:$0xff]
  %v158 = vld [vmem:[%s150 + $0x38] sm:$0xff]
  %159 = vmatpush.msra.mxu0 0.0
  %160 = vmatpush.msra.mxu0 0.0
  %161 = vmatpush.msra.mxu0 0.0
  %162 = vmatpush.msra.mxu0 0.0
  %163 = vmatpush.msra.mxu0 0.0
  %164 = vmatpush.msra.mxu0 0.0
  %165 = vmatpush.msra.mxu0 0.0
  %166 = vmatpush.msra.mxu0 0.0
  %167 = vmatpush.msra.mxu0 %v158
  %168 = vmatpush.msra.mxu0 %v157
  %169 = vmatpush.msra.mxu0 %v156
  %170 = vmatpush.msra.mxu0 %v155
  %171 = vmatpush.msra.mxu0 %v154
  %172 = vmatpush.msra.mxu0 %v153
  %173 = vmatpush.msra.mxu0 %v152
  %174 = vmatpush.msra.mxu0 %v151
  %175 = vmatmul.f32.gmra.mxu0 %v110
  %v176 = vpop.f32.mrf.mxu0
  %v177 = vadd.f32 0.0, %v176
  %178 = vmatmul.f32.gmra.mxu0 %v113
  %v179 = vpop.f32.mrf.mxu0
  %v180 = vadd.f32 0.0, %v179
  %181 = vmatmul.f32.gmra.mxu0 %v116
  %v182 = vpop.f32.mrf.mxu0
  %v183 = vadd.f32 0.0, %v182
  %184 = vmatmul.f32.gmra.mxu0 %v119
  %v185 = vpop.f32.mrf.mxu0
  %v186 = vadd.f32 0.0, %v185
  %187 = vdwg.mxu0
  %s188 = scalar_lea.vmem %s1, 128
  %v189 = vld [vmem:[%s188] sm:$0xff]
  %v190 = vld [vmem:[%s188 + $0x8] sm:$0xff]
  %v191 = vld [vmem:[%s188 + $0x10] sm:$0xff]
  %v192 = vld [vmem:[%s188 + $0x18] sm:$0xff]
  %v193 = vld [vmem:[%s188 + $0x20] sm:$0xff]
  %v194 = vld [vmem:[%s188 + $0x28] sm:$0xff]
  %v195 = vld [vmem:[%s188 + $0x30] sm:$0xff]
  %v196 = vld [vmem:[%s188 + $0x38] sm:$0xff]
  %197 = vmatpush.msra.mxu0 0.0
  %198 = vmatpush.msra.mxu0 0.0
  %199 = vmatpush.msra.mxu0 0.0
  %200 = vmatpush.msra.mxu0 0.0
  %201 = vmatpush.msra.mxu0 0.0
  %202 = vmatpush.msra.mxu0 0.0
  %203 = vmatpush.msra.mxu0 0.0
  %204 = vmatpush.msra.mxu0 0.0
  %205 = vmatpush.msra.mxu0 %v196
  %206 = vmatpush.msra.mxu0 %v195
  %207 = vmatpush.msra.mxu0 %v194
  %208 = vmatpush.msra.mxu0 %v193
  %209 = vmatpush.msra.mxu0 %v192
  %210 = vmatpush.msra.mxu0 %v191
  %211 = vmatpush.msra.mxu0 %v190
  %212 = vmatpush.msra.mxu0 %v189
  %213 = vmatmul.f32.gmra.mxu0 %v110
  %v214 = vpop.f32.mrf.mxu0
  %v215 = vadd.f32 0.0, %v214
  %216 = vmatmul.f32.gmra.mxu0 %v113
  %v217 = vpop.f32.mrf.mxu0
  %v218 = vadd.f32 0.0, %v217
  %219 = vmatmul.f32.gmra.mxu0 %v116
  %v220 = vpop.f32.mrf.mxu0
  %v221 = vadd.f32 0.0, %v220
  %222 = vmatmul.f32.gmra.mxu0 %v119
  %v223 = vpop.f32.mrf.mxu0
  %v224 = vadd.f32 0.0, %v223
  %225 = vdwg.mxu0
  %v226 = vrot.slane %v139, 7
  %v227 = vrot.slane %v142, 7
  %v228 = vrot.slane %v145, 7
  %v229 = vrot.slane %v148, 7
  %vm230 = vcmp.lt.s32.totalorder %v36, 1
  %v231 = vsel %vm230, %v228, %v229
  %v232 = vsel %vm230, %v227, %v228
  %v233 = vsel %vm230, %v226, %v227
  %v234 = vsel %vm230, %v229, %v226
  %v235 = vsel %vm88, %v234, 0.0
  %v236 = vsel %vm89, %v233, 0.0
  %v237 = vsel %vm90, %v232, 0.0
  %v238 = vsel %vm91, %v231, 0.0
  %v239 = vrot.slane %v215, 1
  %v240 = vrot.slane %v218, 1
  %v241 = vrot.slane %v221, 1
  %v242 = vrot.slane %v224, 1
  %vm243 = vcmp.lt.s32.totalorder %v36, 7
  %v244 = vsel %vm243, %v241, %v242
  %v245 = vsel %vm243, %v240, %v241
  %v246 = vsel %vm243, %v239, %v240
  %v247 = vsel %vm243, %v242, %v239
  %v248 = vsel %vm92, %v246, 0.0
  %v249 = vsel %vm93, %v245, 0.0
  %v250 = vsel %vm94, %v244, 0.0
  %v251 = vsel %vm95, %v247, 0.0
  %v252 = vadd.f32 %v235, %v177
  %v253 = vadd.f32 %v236, %v180
  %v254 = vadd.f32 %v237, %v183
  %v255 = vadd.f32 %v238, %v186
  %v256 = vadd.f32 %v252, %v248
  %v257 = vadd.f32 %v253, %v249
  %v258 = vadd.f32 %v254, %v250
  %v259 = vadd.f32 %v255, %v251
  %v260 = vld [vmem:[%s3] sm:$0x1]
  %v261 = vld [vmem:[%s4] sm:$0x1]
  %v262 = vadd.f32 %v256, %v257
  %v263 = vadd.f32 %v262, %v258
  %v264 = vadd.f32 %v263, %v259
  %v265 = vrot.slane %v264, 4
  %v266 = vadd.f32 %v264, %v265
  %v267 = vrot.slane %v266, 2
  %v268 = vadd.f32 %v266, %v267
  %v269 = vrot.slane %v268, 1
  %v270 = vadd.f32 %v268, %v269
  %v271 = vmul.f32 %v256, %v256
  %v272 = vmul.f32 %v257, %v257
  %v273 = vmul.f32 %v258, %v258
  %v274 = vmul.f32 %v259, %v259
  %v275 = vadd.f32 %v271, %v272
  %v276 = vadd.f32 %v275, %v273
  %v277 = vadd.f32 %v276, %v274
  %v278 = vrot.slane %v277, 4
  %v279 = vadd.f32 %v277, %v278
  %v280 = vrot.slane %v279, 2
  %v281 = vadd.f32 %v279, %v280
  %v282 = vrot.slane %v281, 1
  %v283 = vadd.f32 %v281, %v282
  %284 = vrot.lane.b32.xlu0 %v270, 8
  %v285 = vpop.permute.xlu0 %284
  %v286 = vadd.f32 %v270, %v285
  %287 = vrot.lane.b32.xlu0 %v283, 8
  %v288 = vpop.permute.xlu0 %287
  %v289 = vadd.f32 %v283, %v288
  %290 = vrot.lane.b32.xlu0 %v286, 16
  %v291 = vpop.permute.xlu0 %290
  %v292 = vadd.f32 %v286, %v291
  %293 = vrot.lane.b32.xlu0 %v289, 16
  %v294 = vpop.permute.xlu0 %293
  %v295 = vadd.f32 %v289, %v294
  %296 = vrot.lane.b32.xlu0 %v292, 32
  %v297 = vpop.permute.xlu0 %296
  %v298 = vadd.f32 %v292, %v297
  %299 = vrot.lane.b32.xlu0 %v295, 32
  %v300 = vpop.permute.xlu0 %299
  %v301 = vadd.f32 %v295, %v300
  %302 = vrot.lane.b32.xlu0 %v298, 64
  %v303 = vpop.permute.xlu0 %302
  %v304 = vadd.f32 %v298, %v303
  %305 = vrot.lane.b32.xlu0 %v301, 64
  %v306 = vpop.permute.xlu0 %305
  %v307 = vadd.f32 %v301, %v306
  %v308 = vmul.f32 %v304, 0.001953125
  %v309 = vmul.f32 %v307, 0.001953125
  %v310 = vmul.f32 %v308, %v308
  %v311 = vsub.f32 %v309, %v310
  %v312 = vmax.f32 %v311, 0.0
  %v313 = vadd.f32 %v312, 1e-05
  %v314 = vrsqrt.pop %v313
  %v315 = vmul.f32 %v314, %v313
  %v316 = vmul.f32 %v315, %v314
  %v317 = vmul.f32 0.5, %v316
  %v318 = vsub.f32 1.5, %v317
  %v319 = vmul.f32 %v314, %v318
  %vm320 = vweird.f32 %v313
  %vm321 = vweird.f32 %v314
  %vm322 = vmor %vm320, %vm321
  %v323 = vsel %vm322, %v314, %v319
  %v324 = vmul.f32 %v260, %v323
  %v326 = vperm.slane %v324, 0
  %v328 = vmul.f32 %v256, %v326
  %v329 = vmul.f32 %v257, %v326
  %v330 = vmul.f32 %v258, %v326
  %v331 = vmul.f32 %v259, %v326
  %v332 = vmul.f32 %v308, %v324
  %v333 = vsub.f32 %v261, %v332
  %v335 = vperm.slane %v333, 0
  %v337 = vadd.f32 %v328, %v335
  %v338 = vadd.f32 %v329, %v335
  %v339 = vadd.f32 %v330, %v335
  %v340 = vadd.f32 %v331, %v335
  %v341 = vmax.f32 %v337, 0.0
  %v342 = vmax.f32 %v338, 0.0
  %v343 = vmax.f32 %v339, 0.0
  %v344 = vmax.f32 %v340, 0.0
  %v345 = vld [vmem:[%s7] sm:$0xff]
  %v346 = vld [vmem:[%s7 + $0x8] sm:$0xff]
  %v347 = vld [vmem:[%s7 + $0x10] sm:$0xff]
  %v348 = vld [vmem:[%s7 + $0x18] sm:$0xff]
  %v349 = vld [vmem:[%s8] sm:$0xff]
  %v350 = vld [vmem:[%s9] sm:$0x1]
  %v352 = vperm.slane %v350, 0
  %vm354 = vcmask 64512
  %v356 = vsel %vm354, %v345, 0
  %v359 = vsel %vm354, %v346, 0
  %v362 = vsel %vm354, %v347, 0
  %v365 = vsel %vm354, %v348, 0
  %367 = vmatpush.msra.mxu0 0.0
  %368 = vmatpush.msra.mxu0 0.0
  %369 = vmatpush.msra.mxu0 0.0
  %370 = vmatpush.msra.mxu0 0.0
  %371 = vmatpush.msra.mxu0 0.0
  %372 = vmatpush.msra.mxu0 0.0
  %373 = vmatpush.msra.mxu0 0.0
  %374 = vmatpush.msra.mxu0 0.0
  %375 = vmatpush.msra.mxu0 0.0
  %376 = vmatpush.msra.mxu0 0.0
  %377 = vmatpush.msra.mxu0 0.0
  %378 = vmatpush.msra.mxu0 0.0
  %379 = vmatpush.msra.mxu0 0.0
  %380 = vmatpush.msra.mxu0 0.0
  %381 = vmatpush.msra.mxu0 0.0
  %382 = vmatpush.msra.mxu0 %v349
  %383 = vmatmul.f32.gmra.mxu0 %v356
  %v384 = vpop.f32.mrf.mxu0
  %v385 = vadd.f32 %v352, %v384
  %386 = vmatmul.f32.gmra.mxu0 %v359
  %v387 = vpop.f32.mrf.mxu0
  %v388 = vadd.f32 %v352, %v387
  %389 = vmatmul.f32.gmra.mxu0 %v362
  %v390 = vpop.f32.mrf.mxu0
  %v391 = vadd.f32 %v352, %v390
  %392 = vmatmul.f32.gmra.mxu0 %v365
  %v393 = vpop.f32.mrf.mxu0
  %v394 = vadd.f32 %v352, %v393
  %395 = vdwg.mxu0
  %v396 = vadd.f32 %v341, %v385
  %v397 = vadd.f32 %v342, %v388
  %v398 = vadd.f32 %v343, %v391
  %v399 = vadd.f32 %v344, %v394
  %v400 = vld [vmem:[%s2] sm:$0xff]
  %v401 = vld [vmem:[%s2 + $0x8] sm:$0xff]
  %v402 = vld [vmem:[%s2 + $0x10] sm:$0xff]
  %v403 = vld [vmem:[%s2 + $0x18] sm:$0xff]
  %v404 = vld [vmem:[%s2 + $0x20] sm:$0xff]
  %v405 = vld [vmem:[%s2 + $0x28] sm:$0xff]
  %v406 = vld [vmem:[%s2 + $0x30] sm:$0xff]
  %v407 = vld [vmem:[%s2 + $0x38] sm:$0xff]
  %v408 = vld [vmem:[%s2 + $0x40] sm:$0xff]
  %v409 = vld [vmem:[%s2 + $0x48] sm:$0xff]
  %v410 = vld [vmem:[%s2 + $0x50] sm:$0xff]
  %v411 = vld [vmem:[%s2 + $0x58] sm:$0xff]
  %v412 = vld [vmem:[%s2 + $0x60] sm:$0xff]
  %v413 = vld [vmem:[%s2 + $0x68] sm:$0xff]
  %v414 = vld [vmem:[%s2 + $0x70] sm:$0xff]
  %v415 = vld [vmem:[%s2 + $0x78] sm:$0xff]
  %416 = vmatpush.msra.mxu0 %v415
  %417 = vmatpush.msra.mxu0 %v414
  %418 = vmatpush.msra.mxu0 %v413
  %419 = vmatpush.msra.mxu0 %v412
  %420 = vmatpush.msra.mxu0 %v411
  %421 = vmatpush.msra.mxu0 %v410
  %422 = vmatpush.msra.mxu0 %v409
  %423 = vmatpush.msra.mxu0 %v408
  %424 = vmatpush.msra.mxu0 %v407
  %425 = vmatpush.msra.mxu0 %v406
  %426 = vmatpush.msra.mxu0 %v405
  %427 = vmatpush.msra.mxu0 %v404
  %428 = vmatpush.msra.mxu0 %v403
  %429 = vmatpush.msra.mxu0 %v402
  %430 = vmatpush.msra.mxu0 %v401
  %431 = vmatpush.msra.mxu0 %v400
  %432 = vmatmul.f32.gmra.mxu0 %v396
  %v433 = vpop.f32.mrf.mxu0
  %v434 = vadd.f32 0.0, %v433
  %435 = vmatmul.f32.gmra.mxu0 %v397
  %v436 = vpop.f32.mrf.mxu0
  %v437 = vadd.f32 0.0, %v436
  %438 = vmatmul.f32.gmra.mxu0 %v398
  %v439 = vpop.f32.mrf.mxu0
  %v440 = vadd.f32 0.0, %v439
  %441 = vmatmul.f32.gmra.mxu0 %v399
  %v442 = vpop.f32.mrf.mxu0
  %v443 = vadd.f32 0.0, %v442
  %444 = vdwg.mxu0
  %s445 = scalar_lea.vmem %s2, 128
  %v446 = vld [vmem:[%s445] sm:$0xff]
  %v447 = vld [vmem:[%s445 + $0x8] sm:$0xff]
  %v448 = vld [vmem:[%s445 + $0x10] sm:$0xff]
  %v449 = vld [vmem:[%s445 + $0x18] sm:$0xff]
  %v450 = vld [vmem:[%s445 + $0x20] sm:$0xff]
  %v451 = vld [vmem:[%s445 + $0x28] sm:$0xff]
  %v452 = vld [vmem:[%s445 + $0x30] sm:$0xff]
  %v453 = vld [vmem:[%s445 + $0x38] sm:$0xff]
  %v454 = vld [vmem:[%s445 + $0x40] sm:$0xff]
  %v455 = vld [vmem:[%s445 + $0x48] sm:$0xff]
  %v456 = vld [vmem:[%s445 + $0x50] sm:$0xff]
  %v457 = vld [vmem:[%s445 + $0x58] sm:$0xff]
  %v458 = vld [vmem:[%s445 + $0x60] sm:$0xff]
  %v459 = vld [vmem:[%s445 + $0x68] sm:$0xff]
  %v460 = vld [vmem:[%s445 + $0x70] sm:$0xff]
  %v461 = vld [vmem:[%s445 + $0x78] sm:$0xff]
  %462 = vmatpush.msra.mxu0 %v461
  %463 = vmatpush.msra.mxu0 %v460
  %464 = vmatpush.msra.mxu0 %v459
  %465 = vmatpush.msra.mxu0 %v458
  %466 = vmatpush.msra.mxu0 %v457
  %467 = vmatpush.msra.mxu0 %v456
  %468 = vmatpush.msra.mxu0 %v455
  %469 = vmatpush.msra.mxu0 %v454
  %470 = vmatpush.msra.mxu0 %v453
  %471 = vmatpush.msra.mxu0 %v452
  %472 = vmatpush.msra.mxu0 %v451
  %473 = vmatpush.msra.mxu0 %v450
  %474 = vmatpush.msra.mxu0 %v449
  %475 = vmatpush.msra.mxu0 %v448
  %476 = vmatpush.msra.mxu0 %v447
  %477 = vmatpush.msra.mxu0 %v446
  %478 = vmatmul.f32.gmra.mxu0 %v396
  %v479 = vpop.f32.mrf.mxu0
  %v480 = vadd.f32 0.0, %v479
  %481 = vmatmul.f32.gmra.mxu0 %v397
  %v482 = vpop.f32.mrf.mxu0
  %v483 = vadd.f32 0.0, %v482
  %484 = vmatmul.f32.gmra.mxu0 %v398
  %v485 = vpop.f32.mrf.mxu0
  %v486 = vadd.f32 0.0, %v485
  %487 = vmatmul.f32.gmra.mxu0 %v399
  %v488 = vpop.f32.mrf.mxu0
  %v489 = vadd.f32 0.0, %v488
  %490 = vdwg.mxu0
  %s491 = scalar_lea.vmem %s2, 256
  %v492 = vld [vmem:[%s491] sm:$0xff]
  %v493 = vld [vmem:[%s491 + $0x8] sm:$0xff]
  %v494 = vld [vmem:[%s491 + $0x10] sm:$0xff]
  %v495 = vld [vmem:[%s491 + $0x18] sm:$0xff]
  %v496 = vld [vmem:[%s491 + $0x20] sm:$0xff]
  %v497 = vld [vmem:[%s491 + $0x28] sm:$0xff]
  %v498 = vld [vmem:[%s491 + $0x30] sm:$0xff]
  %v499 = vld [vmem:[%s491 + $0x38] sm:$0xff]
  %v500 = vld [vmem:[%s491 + $0x40] sm:$0xff]
  %v501 = vld [vmem:[%s491 + $0x48] sm:$0xff]
  %v502 = vld [vmem:[%s491 + $0x50] sm:$0xff]
  %v503 = vld [vmem:[%s491 + $0x58] sm:$0xff]
  %v504 = vld [vmem:[%s491 + $0x60] sm:$0xff]
  %v505 = vld [vmem:[%s491 + $0x68] sm:$0xff]
  %v506 = vld [vmem:[%s491 + $0x70] sm:$0xff]
  %v507 = vld [vmem:[%s491 + $0x78] sm:$0xff]
  %508 = vmatpush.msra.mxu0 %v507
  %509 = vmatpush.msra.mxu0 %v506
  %510 = vmatpush.msra.mxu0 %v505
  %511 = vmatpush.msra.mxu0 %v504
  %512 = vmatpush.msra.mxu0 %v503
  %513 = vmatpush.msra.mxu0 %v502
  %514 = vmatpush.msra.mxu0 %v501
  %515 = vmatpush.msra.mxu0 %v500
  %516 = vmatpush.msra.mxu0 %v499
  %517 = vmatpush.msra.mxu0 %v498
  %518 = vmatpush.msra.mxu0 %v497
  %519 = vmatpush.msra.mxu0 %v496
  %520 = vmatpush.msra.mxu0 %v495
  %521 = vmatpush.msra.mxu0 %v494
  %522 = vmatpush.msra.mxu0 %v493
  %523 = vmatpush.msra.mxu0 %v492
  %524 = vmatmul.f32.gmra.mxu0 %v396
  %v525 = vpop.f32.mrf.mxu0
  %v526 = vadd.f32 0.0, %v525
  %527 = vmatmul.f32.gmra.mxu0 %v397
  %v528 = vpop.f32.mrf.mxu0
  %v529 = vadd.f32 0.0, %v528
  %530 = vmatmul.f32.gmra.mxu0 %v398
  %v531 = vpop.f32.mrf.mxu0
  %v532 = vadd.f32 0.0, %v531
  %533 = vmatmul.f32.gmra.mxu0 %v399
  %v534 = vpop.f32.mrf.mxu0
  %v535 = vadd.f32 0.0, %v534
  %536 = vdwg.mxu0
  %v537 = vrot.slane %v434, 7
  %v538 = vrot.slane %v437, 7
  %v539 = vrot.slane %v440, 7
  %v540 = vrot.slane %v443, 7
  %v541 = vsel %vm230, %v539, %v540
  %v542 = vsel %vm230, %v538, %v539
  %v543 = vsel %vm230, %v537, %v538
  %v544 = vsel %vm230, %v540, %v537
  %v545 = vsel %vm88, %v544, 0.0
  %v546 = vsel %vm89, %v543, 0.0
  %v547 = vsel %vm90, %v542, 0.0
  %v548 = vsel %vm91, %v541, 0.0
  %v549 = vrot.slane %v526, 1
  %v550 = vrot.slane %v529, 1
  %v551 = vrot.slane %v532, 1
  %v552 = vrot.slane %v535, 1
  %v553 = vsel %vm243, %v551, %v552
  %v554 = vsel %vm243, %v550, %v551
  %v555 = vsel %vm243, %v549, %v550
  %v556 = vsel %vm243, %v552, %v549
  %v557 = vsel %vm92, %v555, 0.0
  %v558 = vsel %vm93, %v554, 0.0
  %v559 = vsel %vm94, %v553, 0.0
  %v560 = vsel %vm95, %v556, 0.0
  %v561 = vadd.f32 %v545, %v480
  %v562 = vadd.f32 %v546, %v483
  %v563 = vadd.f32 %v547, %v486
  %v564 = vadd.f32 %v548, %v489
  %v565 = vadd.f32 %v561, %v557
  %v566 = vadd.f32 %v562, %v558
  %v567 = vadd.f32 %v563, %v559
  %v568 = vadd.f32 %v564, %v560
  %v569 = vld [vmem:[%s5] sm:$0x1]
  %v570 = vld [vmem:[%s6] sm:$0x1]
  %v571 = vadd.f32 %v565, %v566
  %v572 = vadd.f32 %v571, %v567
  %v573 = vadd.f32 %v572, %v568
  %v574 = vrot.slane %v573, 4
  %v575 = vadd.f32 %v573, %v574
  %v576 = vrot.slane %v575, 2
  %v577 = vadd.f32 %v575, %v576
  %v578 = vrot.slane %v577, 1
  %v579 = vadd.f32 %v577, %v578
  %v580 = vmul.f32 %v565, %v565
  %v581 = vmul.f32 %v566, %v566
  %v582 = vmul.f32 %v567, %v567
  %v583 = vmul.f32 %v568, %v568
  %v584 = vadd.f32 %v580, %v581
  %v585 = vadd.f32 %v584, %v582
  %v586 = vadd.f32 %v585, %v583
  %v587 = vrot.slane %v586, 4
  %v588 = vadd.f32 %v586, %v587
  %v589 = vrot.slane %v588, 2
  %v590 = vadd.f32 %v588, %v589
  %v591 = vrot.slane %v590, 1
  %v592 = vadd.f32 %v590, %v591
  %593 = vrot.lane.b32.xlu0 %v579, 8
  %v594 = vpop.permute.xlu0 %593
  %v595 = vadd.f32 %v579, %v594
  %596 = vrot.lane.b32.xlu0 %v592, 8
  %v597 = vpop.permute.xlu0 %596
  %v598 = vadd.f32 %v592, %v597
  %599 = vrot.lane.b32.xlu0 %v595, 16
  %v600 = vpop.permute.xlu0 %599
  %v601 = vadd.f32 %v595, %v600
  %602 = vrot.lane.b32.xlu0 %v598, 16
  %v603 = vpop.permute.xlu0 %602
  %v604 = vadd.f32 %v598, %v603
  %605 = vrot.lane.b32.xlu0 %v601, 32
  %v606 = vpop.permute.xlu0 %605
  %v607 = vadd.f32 %v601, %v606
  %608 = vrot.lane.b32.xlu0 %v604, 32
  %v609 = vpop.permute.xlu0 %608
  %v610 = vadd.f32 %v604, %v609
  %611 = vrot.lane.b32.xlu0 %v607, 64
  %v612 = vpop.permute.xlu0 %611
  %v613 = vadd.f32 %v607, %v612
  %614 = vrot.lane.b32.xlu0 %v610, 64
  %v615 = vpop.permute.xlu0 %614
  %v616 = vadd.f32 %v610, %v615
  %v617 = vmul.f32 %v613, 0.001953125
  %v618 = vmul.f32 %v616, 0.001953125
  %v619 = vmul.f32 %v617, %v617
  %v620 = vsub.f32 %v618, %v619
  %v621 = vmax.f32 %v620, 0.0
  %v622 = vadd.f32 %v621, 1e-05
  %v623 = vrsqrt.pop %v622
  %v624 = vmul.f32 %v623, %v622
  %v625 = vmul.f32 %v624, %v623
  %v626 = vmul.f32 0.5, %v625
  %v627 = vsub.f32 1.5, %v626
  %v628 = vmul.f32 %v623, %v627
  %vm629 = vweird.f32 %v622
  %vm630 = vweird.f32 %v623
  %vm631 = vmor %vm629, %vm630
  %v632 = vsel %vm631, %v623, %v628
  %v633 = vmul.f32 %v569, %v632
  %v635 = vperm.slane %v633, 0
  %v637 = vmul.f32 %v565, %v635
  %v638 = vmul.f32 %v566, %v635
  %v639 = vmul.f32 %v567, %v635
  %v640 = vmul.f32 %v568, %v635
  %v641 = vmul.f32 %v617, %v633
  %v642 = vsub.f32 %v570, %v641
  %v644 = vperm.slane %v642, 0
  %v646 = vadd.f32 %v637, %v644
  %v647 = vadd.f32 %v638, %v644
  %v648 = vadd.f32 %v639, %v644
  %v649 = vadd.f32 %v640, %v644
  %v650 = vmax.f32 %v646, 0.0
  %v651 = vmax.f32 %v647, 0.0
  %v652 = vmax.f32 %v648, 0.0
  %v653 = vmax.f32 %v649, 0.0
  %654 = vst [vmem:[%s10] sm:$0xff] %v650
  %655 = vst [vmem:[%s10 + $0x8] sm:$0xff] %v651
  %656 = vst [vmem:[%s10 + $0x10] sm:$0xff] %v652
  %657 = vst [vmem:[%s10 + $0x18] sm:$0xff] %v653
  // Predicated region
  $region42: #{conv_block_pallas.1} parent=0 // pred_check
    _
  $region43: #{conv_block_pallas.1} parent=0 // pred_check_branch
    %659 = sbr.rel (0) target = $region45
  $region44: #{conv_block_pallas.1} parent=0 // pred_region
    _
  $region45: #{conv_block_pallas.1} parent=0 // pred_fallthru
    _
  // Predicated region
  $region46: #{conv_block_pallas.1} parent=0 // pred_check
    _
  $region47: #{conv_block_pallas.1} parent=0 // pred_check_branch
    %661 = sbr.rel (0) target = $region49
  $region48: #{conv_block_pallas.1} parent=0 // pred_region
    _
  $region49: #{conv_block_pallas.1} parent=0 // pred_fallthru
    _

</llo_original>
